<compile_context>
chip_gen: v5e
topology: v5e:2x2
jax: 0.10.0
libtpu: 0.0.40
codegen_flags: <defaults>
</compile_context>

<pallas_src>
import functools

import jax
import jax.numpy as jnp
from jax.experimental import pallas as pl
from jax.experimental.pallas import tpu as pltpu


def _mlp_kernel(x_ref, w1_ref, b1_ref, w2_ref, b2_ref, o_ref):
    # x: (b, IN) f32; w1: (IN, H) bf16; b1: (1, H) f32; w2: (H, O) bf16; b2: (1, O) f32
    # first_layer_to_hidden_transformation: x @ w1 + b1 (MXU, bf16 in / f32 acc).
    x_bf = x_ref[...].astype(jnp.bfloat16)
    h = jnp.dot(x_bf, w1_ref[...], preferred_element_type=jnp.float32)
    # activation_function: Tanh.  Bias add + tanh kept in f32 (VPU/EUP slots,
    # free under the MXU/DMA critical path; v5e has no bf16 VPU/EUP).
    h = jnp.tanh(h + b1_ref[...])
    # hidden_layer_to_output_transformation: h @ w2 + b2.
    y = jnp.dot(h.astype(jnp.bfloat16), w2_ref[...], preferred_element_type=jnp.float32)
    o_ref[...] = (y + b2_ref[...]).astype(o_ref.dtype)
    # TODO(synk): if the consumer can accept a transposed (O, B) output, keep batch
    # on the lane axis to make the O=8 store lane-dense (masked vst.msk today).


def prepare_params(w1, b1, w2, b2):
    """One-time parameter prep (torch layouts in):
       w1 (H, IN), b1 (H,), w2 (O, H), b2 (O,)  ->
       w1T (IN, H) bf16, b1 (1, H) f32, w2T (H, O) bf16, b2 (1, O) f32."""
    w1_t = jnp.asarray(w1).T.astype(jnp.bfloat16)
    w2_t = jnp.asarray(w2).T.astype(jnp.bfloat16)
    return (w1_t, jnp.asarray(b1).reshape(1, -1).astype(jnp.float32),
            w2_t, jnp.asarray(b2).reshape(1, -1).astype(jnp.float32))


# Tiling policy.
_TILE_B = 32768        # ~2 MiB of f32 x per step; sweep 16K-64K if desired.
_SMALL_B_MAX = 4096    # below this the whole problem (<300 KiB) lives in VMEM.


def _round_up(n, m):
    return ((n + m - 1) // m) * m


def _small_forward(x, w1_t, b1_r, w2_t, b2_r):
    B, _ = x.shape
    O = w2_t.shape[1]
    vmem = pl.BlockSpec(memory_space=pltpu.MemorySpace.VMEM)
    return pl.pallas_call(
        _mlp_kernel,
        out_shape=jax.ShapeDtypeStruct((B, O), x.dtype),
        in_specs=[vmem] * 5,
        out_specs=vmem,
    )(x, w1_t, b1_r, w2_t, b2_r)


def _tiled_forward(x, w1_t, b1_r, w2_t, b2_r):
    B, IN = x.shape
    H, O = w2_t.shape[0], w2_t.shape[1]
    # Keep the grid >= 2 steps (v7x has 2 TensorCores) but never exceed _TILE_B.
    tile_b = min(_TILE_B, _round_up(pl.cdiv(B, 2), 8))
    grid = (pl.cdiv(B, tile_b),)
    return pl.pallas_call(
        _mlp_kernel,
        out_shape=jax.ShapeDtypeStruct((B, O), x.dtype),
        grid=grid,
        in_specs=[
            pl.BlockSpec((tile_b, IN), lambda i: (i, 0)),   # streamed batch tile
            pl.BlockSpec((IN, H), lambda i: (0, 0)),        # weights resident
            pl.BlockSpec((1, H), lambda i: (0, 0)),
            pl.BlockSpec((H, O), lambda i: (0, 0)),
            pl.BlockSpec((1, O), lambda i: (0, 0)),
        ],
        out_specs=pl.BlockSpec((tile_b, O), lambda i: (i, 0)),
        compiler_params=pltpu.CompilerParams(
            # Batch steps are independent -> shard across v7x's 2 TensorCores.
            dimension_semantics=("parallel",),
        ),
    )(x, w1_t, b1_r, w2_t, b2_r)


@jax.jit
def classifier_forward(x, w1_t, b1_r, w2_t, b2_r):
    """x: (B, IN) f32; w1_t: (IN, H) bf16; b1_r: (1, H); w2_t: (H, O) bf16; b2_r: (1, O)."""
    B = x.shape[0]
    if B > _SMALL_B_MAX:
        return _tiled_forward(x, w1_t, b1_r, w2_t, b2_r)
    # Tiny-batch path: whole problem lives in VMEM, no pipeline overhead.
    return _small_forward(x, w1_t, b1_r, w2_t, b2_r)


if __name__ == "__main__":
    # ClassifierModel(inputs_number=16, hidden_layer_neurons_number=32, outputs_number=8)
    INPUTS = 16
    HIDDEN = 32
    OUTPUTS = 8
    BATCH = 8

    key = jax.random.PRNGKey(0)
    kx, kw1, kb1, kw2, kb2, kx2 = jax.random.split(key, 6)

    # torch nn.Linear layouts: weight (out, in), bias (out,)
    bound1 = 1.0 / jnp.sqrt(INPUTS)
    w1 = jax.random.uniform(kw1, (HIDDEN, INPUTS), minval=-bound1, maxval=bound1,
                            dtype=jnp.float32)
    b1 = jax.random.uniform(kb1, (HIDDEN,), minval=-bound1, maxval=bound1,
                            dtype=jnp.float32)
    bound2 = 1.0 / jnp.sqrt(HIDDEN)
    w2 = jax.random.uniform(kw2, (OUTPUTS, HIDDEN), minval=-bound2, maxval=bound2,
                            dtype=jnp.float32)
    b2 = jax.random.uniform(kb2, (OUTPUTS,), minval=-bound2, maxval=bound2,
                            dtype=jnp.float32)

    # One-time parameter prep (transpose + bf16 cast + bias reshape).
    w1_p, b1_p, w2_p, b2_p = prepare_params(w1, b1, w2, b2)

    def ref_fn(xi):
        return jnp.tanh(xi @ w1.T + b1) @ w2.T + b2

    # --- Small-batch (whole-VMEM) path ---
    x = jax.random.normal(kx, (BATCH, INPUTS), dtype=jnp.float32)
    out = jax.block_until_ready(classifier_forward(x, w1_p, b1_p, w2_p, b2_p))
    assert out.shape == (BATCH, OUTPUTS)
    # bf16 matmul operands with f32 accumulation -> ~1e-2-level error budget.
    assert jnp.allclose(out, ref_fn(x), atol=3e-2, rtol=3e-2)

    # --- Tiled path (ragged batch, 2-step grid) ---
    B_BIG = 8200
    x_big = jax.random.normal(kx2, (B_BIG, INPUTS), dtype=jnp.float32)
    out_big = jax.block_until_ready(classifier_forward(x_big, w1_p, b1_p, w2_p, b2_p))
    assert out_big.shape == (B_BIG, OUTPUTS)
    assert jnp.allclose(out_big, ref_fn(x_big), atol=3e-2, rtol=3e-2)

    print("KERNEL_OK")
</pallas_src>

<mosaic_0001>
module attributes {stable_mosaic.version = 11 : i64} {
  func.func @_mlp_kernel(%arg0: memref<8x16xf32, #tpu.memory_space<vmem>>, %arg1: memref<16x32xbf16, #tpu.memory_space<vmem>>, %arg2: memref<1x32xf32, #tpu.memory_space<vmem>>, %arg3: memref<32x8xbf16, #tpu.memory_space<vmem>>, %arg4: memref<1x8xf32, #tpu.memory_space<vmem>>, %arg5: memref<8x8xf32, #tpu.memory_space<vmem>>) attributes {dimension_semantics = [], scalar_prefetch = 0 : i64, scratch_operands = 0 : i64, tpu.core_type = #tpu.core_type<tc>} {
    %c0 = arith.constant 0 : index
    %c0_0 = arith.constant 0 : index
    %0 = vector.load %arg0[%c0, %c0_0] : memref<8x16xf32, #tpu.memory_space<vmem>>, vector<8x16xf32>
    %1 = arith.truncf %0 : vector<8x16xf32> to vector<8x16xbf16>
    %c0_1 = arith.constant 0 : index
    %c0_2 = arith.constant 0 : index
    %2 = vector.load %arg1[%c0_1, %c0_2] : memref<16x32xbf16, #tpu.memory_space<vmem>>, vector<16x32xbf16>
    %cst = arith.constant dense<0.000000e+00> : vector<8x32xf32>
    %3 = tpu.matmul %1, %2, %cst {dimension_numbers = #tpu.dot_dimension_numbers<[1], [0], [0], [1], [0, 0, 1, 1], [], []>} : vector<8x16xbf16>, vector<16x32xbf16>, vector<8x32xf32> -> vector<8x32xf32>
    %c0_3 = arith.constant 0 : index
    %c0_4 = arith.constant 0 : index
    %4 = vector.load %arg2[%c0_3, %c0_4] : memref<1x32xf32, #tpu.memory_space<vmem>>, vector<1x32xf32>
    %5 = vector.broadcast %4 : vector<1x32xf32> to vector<8x32xf32>
    %6 = arith.addf %3, %5 : vector<8x32xf32>
    %7 = math.tanh %6 : vector<8x32xf32>
    %8 = arith.truncf %7 : vector<8x32xf32> to vector<8x32xbf16>
    %c0_5 = arith.constant 0 : index
    %c0_6 = arith.constant 0 : index
    %9 = vector.load %arg3[%c0_5, %c0_6] : memref<32x8xbf16, #tpu.memory_space<vmem>>, vector<32x8xbf16>
    %cst_7 = arith.constant dense<0.000000e+00> : vector<8x8xf32>
    %10 = tpu.matmul %8, %9, %cst_7 {dimension_numbers = #tpu.dot_dimension_numbers<[1], [0], [0], [1], [0, 0, 1, 1], [], []>} : vector<8x32xbf16>, vector<32x8xbf16>, vector<8x8xf32> -> vector<8x8xf32>
    %c0_8 = arith.constant 0 : index
    %c0_9 = arith.constant 0 : index
    %11 = vector.load %arg4[%c0_8, %c0_9] : memref<1x8xf32, #tpu.memory_space<vmem>>, vector<1x8xf32>
    %12 = vector.broadcast %11 : vector<1x8xf32> to vector<8x8xf32>
    %13 = arith.addf %10, %12 : vector<8x8xf32>
    %c0_10 = arith.constant 0 : index
    %c0_11 = arith.constant 0 : index
    %14 = vector.load %arg5[%c0_10, %c0_11] : memref<8x8xf32, #tpu.memory_space<vmem>>, vector<8x8xf32>
    tpu.vector_store %arg5[%c0_10, %c0_11], %13 {strides = array<i32>} : memref<8x8xf32, #tpu.memory_space<vmem>>, vector<8x8xf32>,
    return
  }
}

</mosaic_0001>

<llo_original>
// kernel: classifier_forward.1
$region0: #{classifier_forward.1}
  #allocation0 [shape = 'u32[]', space=smem, size = 0x4, offset = 0x4, fixed_abs, tag = 'smem constant byte address 0x4 - core index']
  #allocation1 [shape = 'u32[72,128]{1,0:T(1,128)}', space=vmem, size = 0x9000, scoped, tag = 'internal scratch']
  %s0 = inlined_call_operand.vmem [shape: f32[8,16], index: 0, kind: input, shape index: {}]
  %s1 = inlined_call_operand.vmem [shape: bf16[16,32], index: 1, kind: input, shape index: {}]
  %s2 = inlined_call_operand.vmem [shape: f32[1,32], index: 2, kind: input, shape index: {}]
  %s3 = inlined_call_operand.vmem [shape: bf16[32,8], index: 3, kind: input, shape index: {}]
  %s4 = inlined_call_operand.vmem [shape: f32[1,8], index: 4, kind: input, shape index: {}]
  %s5 = inlined_call_operand.hbm [shape: f32[8,8], index: 5, kind: output, shape index: {}]
  %s6 = sld [smem:[#allocation0]]
  $region30: #{classifier_forward.1} parent=0
    _
  %s8 = ssub.s32 1, %s6
  %s9 = scalar_select 0, %s8, %s6
  $region1: #{classifier_forward.1} parent=0
    #allocation2 [shape = 'u8[4096]{0}', space=vmem, size = 0x1000, scoped, tag = 'output window, operand 0, single buffered']
    #allocation3 [shape = 's32[1]{0}', space=sflag, size = 0x4, scoped, tag = 'scoped memory for classifier_forward.1']
    %10 = vsyncpa [#allocation3], 0
    // Predicated region
    $region2: #{classifier_forward.1} parent=1 // pred_check
      _
    $region3: #{classifier_forward.1} parent=1 // pred_check_branch
      %12 = sbr.rel (0) target = $region5
    $region4: #{classifier_forward.1} parent=1 // pred_region
      _
    $region5: #{classifier_forward.1} parent=1 // pred_fallthru
      _
    // Predicated region
    $region6: #{classifier_forward.1} parent=1 // pred_check
      _
    $region7: #{classifier_forward.1} parent=1 // pred_check_branch
      %14 = sbr.rel (0) target = $region9
    $region8: #{classifier_forward.1} parent=1 // pred_region
      _
    $region9: #{classifier_forward.1} parent=1 // pred_fallthru
      _
    // Predicated region
    $region10: #{classifier_forward.1} parent=1 // pred_check
      _
    $region11: #{classifier_forward.1} parent=1 // pred_check_branch
      %16 = sbr.rel (0) target = $region13
    $region12: #{classifier_forward.1} parent=1 // pred_region
      _
    $region13: #{classifier_forward.1} parent=1 // pred_fallthru
      _
    // Predicated region
    $region14: #{classifier_forward.1} parent=1 // pred_check
      _
    $region15: #{classifier_forward.1} parent=1 // pred_check_branch
      %18 = sbr.rel (0) target = $region17
    $region16: #{classifier_forward.1} parent=1 // pred_region
      _
    $region17: #{classifier_forward.1} parent=1 // pred_fallthru
      _
    // Predicated region
    $region18: #{classifier_forward.1} parent=1 // pred_check
      _
    $region19: #{classifier_forward.1} parent=1 // pred_check_branch
      %20 = sbr.rel (0) target = $region21
    $region20: #{classifier_forward.1} parent=1 // pred_region
      _
    $region21: #{classifier_forward.1} parent=1 // pred_fallthru
      _
    %v22 = vld [vmem:[%s0] sm:$0xff]
    %v23 = vpack.c.bf16 %v22, %v22
    %v24 = vld [vmem:[%s1] sm:$0xf]
    %v25 = vld [vmem:[%s1 + $0x4] sm:$0xf]
    %v26 = vld [vmem:[%s2] sm:$0x1]
    %v28 = vperm.slane %v26, 0
    %v32 = vunpack.c.l.b16 %v24
    %v33 = vunpack.c.l.b16 %v25
    %v34 = vpack.c.b16 %v33, %v32
    %vm36 = vcmask 130048
    %v38 = vsel %vm36, %v23, 0
    %40 = vmatpush.bf16.msra.mxu0 0
    %41 = vmatpush.bf16.msra.mxu0 0
    %42 = vmatpush.bf16.msra.mxu0 0
    %43 = vmatpush.bf16.msra.mxu0 0
    %44 = vmatpush.bf16.msra.mxu0 0
    %45 = vmatpush.bf16.msra.mxu0 0
    %46 = vmatpush.bf16.msra.mxu0 0
    %47 = vmatpush.bf16.msra.mxu0 %v34
    %48 = vmatmul.bf16.gmra.mxu0 %v38
    %v49 = vpop.f32.mrf.mxu0
    %v50 = vadd.f32 %v28, %v49
    %v51 = vpop.f32.mrf.mxu0
    %52 = vdwg.mxu0
    %v53 = vtanh.pop %v50
    %v54 = vpack.c.bf16 %v53, %v53
    %v55 = vld [vmem:[%s3] sm:$0xf]
    %v56 = vld [vmem:[%s3 + $0x4] sm:$0xf]
    %v57 = vld [vmem:[%s3 + $0x8] sm:$0xf]
    %v58 = vld [vmem:[%s3 + $0xc] sm:$0xf]
    %v59 = vld [vmem:[%s4] sm:$0x1]
    %v61 = vperm.slane %v59, 0
    %v67 = vunpack.c.l.b16 %v55
    %v68 = vunpack.c.l.b16 %v56
    %v69 = vunpack.c.l.b16 %v57
    %v70 = vunpack.c.l.b16 %v58
    %v71 = vpack.c.b16 %v68, %v67
    %v72 = vpack.c.b16 %v70, %v69
    %vm75 = vcmask 261120
    %v77 = vsel %vm75, %v54, 0
    %79 = vmatpush.bf16.msra.mxu0 0
    %80 = vmatpush.bf16.msra.mxu0 0
    %81 = vmatpush.bf16.msra.mxu0 0
    %82 = vmatpush.bf16.msra.mxu0 0
    %83 = vmatpush.bf16.msra.mxu0 0
    %84 = vmatpush.bf16.msra.mxu0 0
    %85 = vmatpush.bf16.msra.mxu0 %v72
    %86 = vmatpush.bf16.msra.mxu0 %v71
    %87 = vmatmul.bf16.gmra.mxu0 %v77
    %v88 = vpop.f32.mrf.mxu0
    %v89 = vadd.f32 %v61, %v88
    %v90 = vpop.f32.mrf.mxu0
    %91 = vdwg.mxu0
    %vm92 = vcmask 64512
    %93 = vst.msk [vmem:[#allocation2] sm:$0xff] %vm92, %v89
    // Predicated region
    $region22: #{classifier_forward.1} parent=1 // pred_check
      _
    $region23: #{classifier_forward.1} parent=1 // pred_check_branch
      %95 = sbr.rel (0) target = $region25
    $region24: #{classifier_forward.1} parent=1 // pred_region
      %97 = vsyncadd [#allocation3], 0
      %s99 = sshll.u32 [#allocation2], 4
      %s100 = int_to_ptr.vmem [resolvable:$true] %s99
      %s101 = sshll.u32 %s5, 4
      %s102 = int_to_ptr.hbm [resolvable:$true] %s101
      %104 = dma.vmem_to_hbm [thread:$0]  %s100, 128, %s102, [#allocation3]
    $region25: #{classifier_forward.1} parent=1 // pred_fallthru
      _
    // Predicated region
    $region26: #{classifier_forward.1} parent=1 // pred_check
      _
    $region27: #{classifier_forward.1} parent=1 // pred_check_branch
      %106 = sbr.rel (0) target = $region29
    $region28: #{classifier_forward.1} parent=1 // pred_region
      %108 = dma.done [#allocation3], 128
    $region29: #{classifier_forward.1} parent=1 // pred_fallthru
      _
    %109 = vsyncpa [#allocation3], 1

</llo_original>
